<compile_context>
chip_gen: v5e
topology: v5e:2x2
jax: 0.10.0
libtpu: 0.0.40
codegen_flags: <defaults>
</compile_context>

<pallas_src>
import functools

import jax
import jax.numpy as jnp
from jax.experimental import pallas as pl
from jax.experimental.pallas import tpu as pltpu

_LANE = 128
_MAX_ROW_LANES = 8192   # prefer full contiguous rows up to this many elements


def _round_up(n, m):
    return ((n + m - 1) // m) * m


def _sublane_pack(dtype):
    itemsize = jnp.dtype(dtype).itemsize
    return 8 * max(1, 4 // itemsize)        # f32/i32: 8, bf16: 16, int8/fp8: 32


def _chip_config():
    """Returns (total block-VMEM working budget, vmem_limit_bytes)."""
    try:
        info = pltpu.get_tpu_info()
        vmem_cap = getattr(info, "vmem_capacity_bytes", 64 * 1024 * 1024)
    except Exception:  # pragma: no cover - conservative fallback
        vmem_cap = 64 * 1024 * 1024
    if vmem_cap >= 96 * 1024 * 1024:        # v5e / v6e: 128 MiB physical VMEM
        return 28 * 1024 * 1024, 64 * 1024 * 1024
    # v7x: 64 MiB physical per TensorCore -> keep well under it.
    return 20 * 1024 * 1024, 44 * 1024 * 1024


# ----------------------------------------------------------------------------
# Kernels
# ----------------------------------------------------------------------------
def _mean_mid_kernel(x_ref, o_ref, acc_ref, *, k_total, tile_k, needs_mask):
    """Reduce axis 1 of a (tile_p, tile_k, tile_n) block into (tile_p, 1, tile_n)."""
    ki = pl.program_id(2)
    nk = pl.num_programs(2)

    @pl.when(ki == 0)
    def _():
        acc_ref[...] = jnp.zeros_like(acc_ref)

    x = x_ref[...].astype(jnp.float32)

    def _accumulate(v):
        acc_ref[...] += jnp.sum(v, axis=1, keepdims=True)

    if needs_mask:
        # Only the last K block can run past k_total: keep the steady state
        # mask-free and mask just that final block.
        @pl.when(ki == nk - 1)
        def _():
            row = jax.lax.broadcasted_iota(jnp.int32, x.shape, dimension=1)
            _accumulate(jnp.where(ki * tile_k + row < k_total, x, 0.0))

        @pl.when(ki < nk - 1)
        def _():
            _accumulate(x)
    else:
        _accumulate(x)

    @pl.when(ki == nk - 1)
    def _():
        o_ref[...] = (acc_ref[...] * (1.0 / k_total)).astype(o_ref.dtype)


def _mean_last_kernel(x_ref, o_ref, acc_ref, *, k_total, tile_k, needs_mask):
    """Reduce the lane (last) axis of a (tile_m, tile_k) block into (tile_m, 1).

    Accumulates 128-lane chunks into a lane-wide (tile_m, 128) f32 scratch
    (pure VPU adds); the single XLU cross-lane reduce, 1/k scale and narrow
    store happen only on the final K step.
    """
    ki = pl.program_id(1)
    nk = pl.num_programs(1)

    @pl.when(ki == 0)
    def _():
        acc_ref[...] = jnp.zeros_like(acc_ref)

    n_full = tile_k // _LANE
    rem = tile_k % _LANE

    def _accumulate(v):
        if n_full:
            partial = v[:, 0:_LANE]
            for j in range(1, n_full):
                partial = partial + v[:, j * _LANE:(j + 1) * _LANE]
            acc_ref[...] += partial
        if rem:
            acc_ref[:, :rem] += v[:, n_full * _LANE:]

    x = x_ref[...].astype(jnp.float32)
    if needs_mask:
        @pl.when(ki == nk - 1)
        def _():
            col = jax.lax.broadcasted_iota(jnp.int32, x.shape, dimension=1)
            _accumulate(jnp.where(ki * tile_k + col < k_total, x, 0.0))

        @pl.when(ki < nk - 1)
        def _():
            _accumulate(x)
    else:
        _accumulate(x)

    @pl.when(ki == nk - 1)
    def _():
        total = jnp.sum(acc_ref[...], axis=1, keepdims=True)
        o_ref[...] = (total * (1.0 / k_total)).astype(o_ref.dtype)


def _mean_last_packed_kernel(x_ref, w_ref, o_ref, *, k_total):
    """Lane-packed small-K path: grouped sum via (tile_p, 128*k) @ (128*k, 128).

    w is a 0/1 selection matrix, so the matmul computes per-group sums with
    lane-dense input loads and a lane-dense 128-wide output block.
    """
    x = x_ref[...].astype(jnp.float32)
    s = jnp.dot(x, w_ref[...],
                precision=jax.lax.Precision.HIGHEST,
                preferred_element_type=jnp.float32)
    o_ref[...] = (s * (1.0 / k_total)).astype(o_ref.dtype)


# ----------------------------------------------------------------------------
# Wrapper
# ----------------------------------------------------------------------------
def mean_pallas(x, dim, keep_dim=False):
    """Pallas equivalent of torch.Tensor.mean(dim, keepdim)."""
    ndim = x.ndim
    if dim < 0:
        dim += ndim
    assert 0 <= dim < ndim

    shape = x.shape
    k = int(shape[dim])
    dtype = x.dtype
    itemsize = jnp.dtype(dtype).itemsize
    pack = _sublane_pack(dtype)
    budget, vmem_limit = _chip_config()

    out_shape_keep = shape[:dim] + (1,) + shape[dim + 1:]
    out_shape_drop = shape[:dim] + shape[dim + 1:]
    target_shape = out_shape_keep if keep_dim else out_shape_drop

    cost = pl.CostEstimate(
        flops=int(x.size),
        transcendentals=0,
        bytes_accessed=int(x.size * itemsize + (x.size // max(k, 1)) * itemsize),
    )
    cparams = dict(vmem_limit_bytes=vmem_limit)

    # ======================= reduce the last (lane) axis =====================
    if dim == ndim - 1:
        m = int(x.size // k)

        # ---- small-K lane-packed path (grouped sum on the MXU) -------------
        g = _LANE
        if 1 < k <= 32 and m % g == 0:
            p_rows = m // g
            x2 = x.reshape(p_rows, g * k)                 # free: no data movement
            col = jnp.arange(g * k, dtype=jnp.int32) // k
            grp = jnp.arange(g, dtype=jnp.int32)
            w = (col[:, None] == grp[None, :]).astype(jnp.float32)  # (g*k, g)

            w_bytes = g * k * g * 4
            per_row = 2 * g * k * itemsize + 2 * g * itemsize     # in + out (x2 buffers)
            tile_p = max(pack, ((budget - 2 * w_bytes) // per_row) // pack * pack)
            tile_p = min(p_rows, tile_p)
            if pl.cdiv(p_rows, tile_p) == 1 and p_rows > pack:
                # Keep >= 2-way parallel extent (v7x has 2 TensorCores).
                tile_p = max(pack, _round_up(pl.cdiv(p_rows, 2), pack))

            grid = (pl.cdiv(p_rows, tile_p),)
            out2 = pl.pallas_call(
                functools.partial(_mean_last_packed_kernel, k_total=k),
                out_shape=jax.ShapeDtypeStruct((p_rows, g), dtype),
                grid_spec=pltpu.PrefetchScalarGridSpec(
                    num_scalar_prefetch=0,
                    grid=grid,
                    in_specs=[
                        pl.BlockSpec((tile_p, g * k), lambda i: (i, 0)),
                        pl.BlockSpec((g * k, g), lambda i: (0, 0)),
                    ],
                    out_specs=pl.BlockSpec((tile_p, g), lambda i: (i, 0)),
                ),
                compiler_params=pltpu.CompilerParams(
                    dimension_semantics=("parallel",), **cparams),
                cost_estimate=cost,
            )(x2, w)
            return out2.reshape(target_shape)

        # ---- general last-axis path ----------------------------------------
        x2 = x.reshape(m, k)                              # free: no data movement
        tile_k = k if k <= _MAX_ROW_LANES else _MAX_ROW_LANES   # prefer full rows
        needs_mask = (k % tile_k) != 0

        lane_pad = _round_up(tile_k, _LANE)
        per_row = (2 * lane_pad * itemsize        # double-buffered input block
                   + 2 * _LANE * itemsize         # double-buffered (tile_m, 1) output
                   + _LANE * 4)                   # (tile_m, 128) f32 accumulator
        tile_m = max(pack, (budget // per_row) // pack * pack)
        tile_m = min(m, tile_m)
        if pl.cdiv(m, tile_m) == 1 and m > pack:
            tile_m = max(pack, _round_up(pl.cdiv(m, 2), pack))

        grid = (pl.cdiv(m, tile_m), pl.cdiv(k, tile_k))
        kernel = functools.partial(_mean_last_kernel, k_total=k,
                                   tile_k=tile_k, needs_mask=needs_mask)
        out2 = pl.pallas_call(
            kernel,
            out_shape=jax.ShapeDtypeStruct((m, 1), dtype),
            grid_spec=pltpu.PrefetchScalarGridSpec(
                num_scalar_prefetch=0,
                grid=grid,
                in_specs=[pl.BlockSpec((tile_m, tile_k), lambda i, kk: (i, kk))],
                out_specs=pl.BlockSpec((tile_m, 1), lambda i, kk: (i, 0)),
                scratch_shapes=[pltpu.VMEM((tile_m, _LANE), jnp.float32)],
            ),
            compiler_params=pltpu.CompilerParams(
                dimension_semantics=("parallel", "arbitrary"), **cparams),
            cost_estimate=cost,
        )(x2)
        return out2.reshape(target_shape)

    # ==================== reduce an interior / leading axis ==================
    pre = 1
    for s in shape[:dim]:
        pre *= int(s)
    post = 1
    for s in shape[dim + 1:]:
        post *= int(s)
    x3 = x.reshape(pre, k, post)                          # free: no data movement

    # Lane (last) dim: prefer the full row for contiguous DMAs.
    tile_n = post if post <= _MAX_ROW_LANES else _MAX_ROW_LANES
    lane_pad = _round_up(tile_n, _LANE)

    # Layout-aware per-`pre`-row footprints (padded sublane x padded lane).
    out_p = 2 * pack * lane_pad * itemsize                # (*, 1, tile_n) output, x2 bufs
    acc_p = 8 * lane_pad * 4                              # (*, 1, tile_n) f32 accumulator
    in_row = lane_pad * itemsize                          # one k-row of the input block

    k_budget_rows = max(pack, (budget - out_p - acc_p) // (2 * in_row))
    if k <= k_budget_rows:
        tile_k = k                                        # whole reduction per block
        per_p = 2 * _round_up(k, pack) * in_row + out_p + acc_p
        tile_p = min(pre, max(1, budget // per_p))        # fold `pre` into the block
    else:
        tile_k = (k_budget_rows // pack) * pack           # split K, mask last block
        tile_p = 1
    needs_mask = (k % tile_k) != 0

    grid_p = pl.cdiv(pre, tile_p)
    grid_n = pl.cdiv(post, tile_n)
    # Keep >= 2-way extent on a parallel axis where possible (v7x megacore).
    if grid_p == 1 and grid_n == 1:
        if pre >= 2:
            tile_p = pl.cdiv(pre, 2)
            grid_p = pl.cdiv(pre, tile_p)
        elif post >= 2 * _LANE:
            tile_n = _round_up(pl.cdiv(post, 2), _LANE)
            grid_n = pl.cdiv(post, tile_n)

    grid = (grid_p, grid_n, pl.cdiv(k, tile_k))
    kernel = functools.partial(_mean_mid_kernel, k_total=k,
                               tile_k=tile_k, needs_mask=needs_mask)
    out3 = pl.pallas_call(
        kernel,
        out_shape=jax.ShapeDtypeStruct((pre, 1, post), dtype),
        grid_spec=pltpu.PrefetchScalarGridSpec(
            num_scalar_prefetch=0,
            grid=grid,
            in_specs=[pl.BlockSpec((tile_p, tile_k, tile_n),
                                   lambda p, j, kk: (p, kk, j))],
            out_specs=pl.BlockSpec((tile_p, 1, tile_n),
                                   lambda p, j, kk: (p, 0, j)),
            scratch_shapes=[pltpu.VMEM((tile_p, 1, tile_n), jnp.float32)],
        ),
        compiler_params=pltpu.CompilerParams(
            dimension_semantics=("parallel", "parallel", "arbitrary"), **cparams),
        cost_estimate=cost,
    )(x3)
    return out3.reshape(target_shape)


# ----------------------------------------------------------------------------
# Self-test
# ----------------------------------------------------------------------------
if __name__ == "__main__":
    key = jax.random.PRNGKey(0)
    k0, k1, k2, k3 = jax.random.split(key, 4)

    def check(arr, dim, keep):
        out = jax.block_until_ready(mean_pallas(arr, dim, keep))
        ref = jnp.mean(arr, axis=dim, keepdims=keep)
        assert out.shape == ref.shape, (out.shape, ref.shape)
        assert jnp.allclose(out, ref, atol=1e-5, rtol=1e-5), (dim, keep)

    # NCHW conv-style tensor, as the module is typically used.
    x = jax.random.normal(k0, (2, 4, 16, 16), dtype=jnp.float32)
    check(x, 1, False)     # interior-axis path (channel mean), keep_dim=False
    check(x, -1, True)     # small-K last-axis path (lane-packed grouped sum)
    check(x, 0, False)     # leading-axis path
    check(x, 2, True)      # interior-axis path with pre-tiling

    # General last-axis path: full contiguous rows with a lane remainder.
    y = jax.random.normal(k1, (4, 8, 200), dtype=jnp.float32)
    check(y, -1, False)

    # General last-axis path with a split (masked) reduction axis.
    z = jax.random.normal(k2, (16, 9000), dtype=jnp.float32)
    check(z, -1, True)

    # Small-K last-axis fallback (rows not a multiple of 128).
    u = jax.random.normal(k3, (5, 7, 6), dtype=jnp.float32)
    check(u, -1, False)

    print("KERNEL_OK")
</pallas_src>

<mosaic_0001>
module attributes {stable_mosaic.version = 11 : i64} {
  func.func @_mean_mid_kernel(%arg0: i32, %arg1: i32, %arg2: i32, %arg3: memref<1x4x256xf32, #tpu.memory_space<vmem>>, %arg4: memref<1x1x256xf32, #tpu.memory_space<vmem>>, %arg5: memref<1x1x256xf32, #tpu.memory_space<vmem>>) attributes {dimension_semantics = [#tpu.dimension_semantics<parallel>, #tpu.dimension_semantics<parallel>, #tpu.dimension_semantics<arbitrary>], iteration_bounds = array<i64: 2, 1, 1>, scalar_prefetch = 0 : i64, scratch_operands = 1 : i64, tpu.core_type = #tpu.core_type<tc>, window_params = [{transform_indices = @transform_0, window_bounds = array<i64: 1, 4, 256>}, {transform_indices = @transform_1, window_bounds = array<i64: 1, 1, 256>}]} {
    %c0_i32 = arith.constant 0 : i32
    %0 = arith.cmpi eq, %arg2, %c0_i32 : i32
    %1 = arith.extui %0 : i1 to i32
    %c0_i32_0 = arith.constant 0 : i32
    %2 = arith.cmpi ne, %1, %c0_i32_0 : i32
    scf.if %2 {
      %cst_11 = arith.constant 0.000000e+00 : f32
      %12 = vector.broadcast %cst_11 : f32 to vector<1x1x256xf32>
      %c0_12 = arith.constant 0 : index
      %c0_13 = arith.constant 0 : index
      %c0_14 = arith.constant 0 : index
      %13 = vector.load %arg5[%c0_12, %c0_13, %c0_14] : memref<1x1x256xf32, #tpu.memory_space<vmem>>, vector<1x1x256xf32>
      tpu.vector_store %arg5[%c0_12, %c0_13, %c0_14], %12 {strides = array<i32>} : memref<1x1x256xf32, #tpu.memory_space<vmem>>, vector<1x1x256xf32>,
    } else {
    }
    %c0 = arith.constant 0 : index
    %c0_1 = arith.constant 0 : index
    %c0_2 = arith.constant 0 : index
    %3 = vector.load %arg3[%c0, %c0_1, %c0_2] : memref<1x4x256xf32, #tpu.memory_space<vmem>>, vector<1x4x256xf32>
    %c0_3 = arith.constant 0 : index
    %c0_4 = arith.constant 0 : index
    %c0_5 = arith.constant 0 : index
    %4 = vector.load %arg5[%c0_3, %c0_4, %c0_5] : memref<1x1x256xf32, #tpu.memory_space<vmem>>, vector<1x1x256xf32>
    %cst = arith.constant dense<0.000000e+00> : vector<1x256xf32>
    %5 = vector.multi_reduction <add>, %3, %cst [1] : vector<1x4x256xf32> to vector<1x256xf32>
    %6 = vector.shape_cast %5 : vector<1x256xf32> to vector<1x1x256xf32>
    %7 = arith.addf %4, %6 : vector<1x1x256xf32>
    %c0_6 = arith.constant 0 : index
    %c0_7 = arith.constant 0 : index
    %c0_8 = arith.constant 0 : index
    %8 = vector.load %arg5[%c0_6, %c0_7, %c0_8] : memref<1x1x256xf32, #tpu.memory_space<vmem>>, vector<1x1x256xf32>
    tpu.vector_store %arg5[%c0_6, %c0_7, %c0_8], %7 {strides = array<i32>} : memref<1x1x256xf32, #tpu.memory_space<vmem>>, vector<1x1x256xf32>,
    %c0_i32_9 = arith.constant 0 : i32
    %9 = arith.cmpi eq, %arg2, %c0_i32_9 : i32
    %10 = arith.extui %9 : i1 to i32
    %c0_i32_10 = arith.constant 0 : i32
    %11 = arith.cmpi ne, %10, %c0_i32_10 : i32
    scf.if %11 {
      %c0_11 = arith.constant 0 : index
      %c0_12 = arith.constant 0 : index
      %c0_13 = arith.constant 0 : index
      %12 = vector.load %arg5[%c0_11, %c0_12, %c0_13] : memref<1x1x256xf32, #tpu.memory_space<vmem>>, vector<1x1x256xf32>
      %cst_14 = arith.constant 2.500000e-01 : f32
      %13 = vector.broadcast %cst_14 : f32 to vector<1x1x256xf32>
      %14 = arith.mulf %12, %13 : vector<1x1x256xf32>
      %c0_15 = arith.constant 0 : index
      %c0_16 = arith.constant 0 : index
      %c0_17 = arith.constant 0 : index
      %15 = vector.load %arg4[%c0_15, %c0_16, %c0_17] : memref<1x1x256xf32, #tpu.memory_space<vmem>>, vector<1x1x256xf32>
      tpu.vector_store %arg4[%c0_15, %c0_16, %c0_17], %14 {strides = array<i32>} : memref<1x1x256xf32, #tpu.memory_space<vmem>>, vector<1x1x256xf32>,
    } else {
    }
    return
  }
  func.func @transform_0(%arg0: i32, %arg1: i32, %arg2: i32) -> (i32, i32, i32) {
    %c0_i32 = arith.constant 0 : i32
    return %arg0, %arg2, %arg1 : i32, i32, i32
  }
  func.func @transform_1(%arg0: i32, %arg1: i32, %arg2: i32) -> (i32, i32, i32) {
    %c0_i32 = arith.constant 0 : i32
    %c0_i32_0 = arith.constant 0 : i32
    return %arg0, %c0_i32, %arg1 : i32, i32, i32
  }
}

</mosaic_0001>

<llo_original>
// kernel: tpu_custom_call.1
$region0: #{tpu_custom_call.1}
  #allocation0 [shape = 'u32[]', space=smem, size = 0x4, offset = 0x4, fixed_abs, tag = 'smem constant byte address 0x4 - core index']
  #allocation1 [shape = 'u32[72,128]{1,0:T(1,128)}', space=vmem, size = 0x9000, scoped, tag = 'internal scratch']
  #allocation2 [shape = 'f32[1,1,256]{2,1,0:T(1,128)}', space=vmem, size = 0x400, scoped, tag = 'scratch operand']
  %s0 = inlined_call_operand.hbm [shape: f32[2,4,256], index: 0, kind: input, shape index: {}]
  %s1 = inlined_call_operand.hbm [shape: f32[2,1,256], index: 1, kind: output, shape index: {}]
  %s2 = sld [smem:[#allocation0]]
  $region49: #{tpu_custom_call.1} parent=0
    _
  %s4 = ssub.s32 1, %s2
  %s5 = scalar_select 0, %s4, %s2
  $region1: #{tpu_custom_call.1} parent=0
    #allocation3 [shape = 'u8[8192]{0}', space=vmem, size = 0x2000, scoped, tag = 'input window, operand 0']
    #allocation4 [shape = 's32[2]{0}', space=sflag, size = 0x8, scoped, tag = 'scoped memory for tpu_custom_call.1']
    #allocation5 [shape = 's32[2]{0}', space=sflag, size = 0x8, scoped, tag = 'scoped memory for tpu_custom_call.1']
    #allocation6 [shape = 'u8[2048]{0}', space=vmem, size = 0x800, scoped, tag = 'output window, operand 0']
    %6 = vsyncpa [#allocation4], 0
    %s7 = scalar_lea.sflag [#allocation4], 1
    %8 = vsyncpa %s7, 0
    %9 = vsyncpa [#allocation5], 0
    %s10 = scalar_lea.sflag [#allocation5], 1
    %11 = vsyncpa %s10, 0
    loop: start=0, step=1, limit=4
    $region2: #{tpu_custom_call.1} parent=1 // loop_pre_header
      _
    $region3: #{tpu_custom_call.1} parent=1 // loop_header
      %s13 = sphi 0, %s17
      %p14 = scmp.ge.s32.totalorder %s13, 4
      %s20 = sphi 0, %s39
      %s21 = sphi 0, %s35
      %s22 = sphi 0, %s31
      %s23 = sphi 0, %s20
      %s24 = sphi 0, %s21
      %s25 = sphi 0, %s22
      %s26 = sphi 0, %s23
      %s27 = sphi 0, %s24
      %s28 = sphi 0, %s25
      %s46 = sphi 0, %s48
      %s49 = sphi 0, %s46
      %s50 = sphi 0, %s49
      %s66 = sphi 0, %s50
      %s74 = sphi 0, %s76
      %s77 = sphi 0, %s74
      %s78 = sphi 0, %s77
      %s94 = sphi 0, %s78
    $region4: #{tpu_custom_call.1} parent=1 // loop_header_branch
      %16 = sbr.rel (%p14) target = $region8
    $region5: #{tpu_custom_call.1} parent=1 // loop_body
      %s18 = ssub.s32 %s13, 1
      %s19 = ssub.s32 %s13, 2
      %s29 = sadd.s32 1, %s22
      %p30 = scmp.ge.s32.totalorder %s29, 1
      %s31 = scalar_select %p30, 0, %s29
      %s32 = sadd.s32 1, %s21
      %s33 = scalar_select %p30, %s32, %s21
      %p34 = scmp.ge.s32.totalorder %s33, 1
      %s35 = scalar_select %p34, 0, %s33
      %s36 = sadd.s32 1, %s20
      %s37 = scalar_select %p34, %s36, %s20
      %p38 = scmp.ge.s32.totalorder %s37, 2
      %s39 = scalar_select %p38, 0, %s37
      %s40 = ssub.s32 %s20, %s39
      %s41 = ssub.s32 %s22, %s31
      %s42 = sor.u32 %s40, %s41
      %s43 = ssub.s32 %s21, %s35
      %s44 = sor.u32 %s42, %s43
      %p45 = scmp.eq.s32.totalorder %s44, 0
      %s47 = sadd.s32 %s46, 1
      %s48 = scalar_select %p45, %s46, %s47
      %p51 = pneg %p45
      %p52 = scmp.eq.s32.totalorder %s13, 1
      %p53 = por %p51, %p52
      %p54 = scmp.ne.s32.totalorder %s46, %s49
      %p55 = scmp.eq.s32.totalorder %s13, 0
      %p56 = por %p54, %p55
      %p57 = scmp.ne.s32.totalorder %s46, %s49
      %p58 = scmp.eq.s32.totalorder %s18, 1
      %p59 = por %p57, %p58
      %p60 = scmp.ne.s32.totalorder %s49, %s50
      %p61 = scmp.eq.s32.totalorder %s18, 0
      %p62 = por %p60, %p61
      %p63 = scmp.ne.s32.totalorder %s49, %s50
      %p64 = scmp.eq.s32.totalorder %s19, 1
      %p65 = por %p63, %p64
      %p67 = scmp.ne.s32.totalorder %s50, %s66
      %p68 = scmp.eq.s32.totalorder %s19, 0
      %p69 = por %p67, %p68
      %s70 = ssub.s32 %s20, %s39
      %s71 = ssub.s32 %s21, %s35
      %s72 = sor.u32 %s70, %s71
      %p73 = scmp.eq.s32.totalorder %s72, 0
      %s75 = sadd.s32 %s74, 1
      %s76 = scalar_select %p73, %s74, %s75
      %p79 = pneg %p73
      %p80 = scmp.eq.s32.totalorder %s13, 1
      %p81 = por %p79, %p80
      %p82 = scmp.ne.s32.totalorder %s74, %s77
      %p83 = scmp.eq.s32.totalorder %s13, 0
      %p84 = por %p82, %p83
      %p85 = scmp.ne.s32.totalorder %s74, %s77
      %p86 = scmp.eq.s32.totalorder %s18, 1
      %p87 = por %p85, %p86
      %p88 = scmp.ne.s32.totalorder %s77, %s78
      %p89 = scmp.eq.s32.totalorder %s18, 0
      %p90 = por %p88, %p89
      %p91 = scmp.ne.s32.totalorder %s77, %s78
      %p92 = scmp.eq.s32.totalorder %s19, 1
      %p93 = por %p91, %p92
      %p95 = scmp.ne.s32.totalorder %s78, %s94
      %p96 = scmp.eq.s32.totalorder %s19, 0
      %p97 = por %p95, %p96
      %p98 = scmp.le.s32.totalorder 1, %s13
      %p99 = scmp.lt.s32.totalorder %s13, 3
      %p100 = pnand %p98, %p99
      %p101 = pneg %p100
      // Predicated region
      $region9: #{tpu_custom_call.1} parent=5 // pred_check
        _
      $region10: #{tpu_custom_call.1} parent=5 // pred_check_branch
        %103 = sbr.rel (%p100) target = $region12
      $region11: #{tpu_custom_call.1} parent=5 // pred_region
        %s104 = ssub.s32 %s13, 1
      $region12: #{tpu_custom_call.1} parent=5 // pred_fallthru
        _
      %p105 = scmp.lt.s32.totalorder %s13, 2
      // Predicated region
      $region13: #{tpu_custom_call.1} parent=5 // pred_check
        %p106 = pneg %p105
      $region14: #{tpu_custom_call.1} parent=5 // pred_check_branch
        %108 = sbr.rel (%p106) target = $region16
      $region15: #{tpu_custom_call.1} parent=5 // pred_region
        // Predicated region
        $region17: #{tpu_custom_call.1} parent=15 // pred_check
          %p109 = pneg %p56
        $region18: #{tpu_custom_call.1} parent=15 // pred_check_branch
          %111 = sbr.rel (%p109) target = $region20
        $region19: #{tpu_custom_call.1} parent=15 // pred_region
          %s112 = sand.u32 %s46, 1
          %s113 = scalar_lea.sflag [#allocation4], %s112
          %s114 = sand.u32 %s46, 1
          %s115 = smul.addr %s114, 8
          %s116 = scalar_lea.vmem [#allocation3], %s115
          %s117 = smul.u32 2, %s21
          %119 = vsyncadd %s113, 0
          %s120 = smul.addr %s22, 2
          %s121 = sadd.s32 %s117, %s120
          %s122 = smul.addr %s20, 2
          %s123 = sadd.s32 %s121, %s122
          %s124 = smul.addr %s123, 4
          %s125 = scalar_lea.hbm %s0, %s124
          %s127 = sshll.u32 %s125, 4
          %s128 = int_to_ptr.hbm [resolvable:$true] %s127
          %s129 = sshll.u32 %s116, 4
          %s130 = int_to_ptr.vmem [resolvable:$true] %s129
          %132 = dma.hbm_to_vmem [thread:$0]  %s128, 128, %s130, %s113
        $region20: #{tpu_custom_call.1} parent=15 // pred_fallthru
          _
      $region16: #{tpu_custom_call.1} parent=5 // pred_fallthru
        _
      %p133 = scmp.le.s32.totalorder 1, %s13
      %p134 = scmp.lt.s32.totalorder %s13, 3
      %p135 = pnand %p133, %p134
      %p136 = pneg %p135
      // Predicated region
      $region21: #{tpu_custom_call.1} parent=5 // pred_check
        _
      $region22: #{tpu_custom_call.1} parent=5 // pred_check_branch
        %138 = sbr.rel (%p135) target = $region24
      $region23: #{tpu_custom_call.1} parent=5 // pred_region
        %s139 = ssub.s32 %s13, 1
        %s140 = sand.u32 %s49, 1
        %s141 = scalar_lea.sflag [#allocation4], %s140
        %s142 = sand.u32 %s49, 1
        %s143 = smul.addr %s142, 8
        %s144 = scalar_lea.vmem [#allocation3], %s143
        // Predicated region
        $region25: #{tpu_custom_call.1} parent=23 // pred_check
          %p145 = pneg %p62
        $region26: #{tpu_custom_call.1} parent=23 // pred_check_branch
          %147 = sbr.rel (%p145) target = $region28
        $region27: #{tpu_custom_call.1} parent=23 // pred_region
          %149 = dma.done %s141, 128
        $region28: #{tpu_custom_call.1} parent=23 // pred_fallthru
          _
        %s150 = sand.u32 %s49, 1
        %s151 = scalar_lea.sflag [#allocation4], %s150
        %s152 = sand.u32 %s49, 1
        %s153 = smul.addr %s152, 8
        %s154 = scalar_lea.vmem [#allocation3], %s153
        %p155 = pneg %p62
        %p156 = pneg %p59
        %p157 = pneg %p90
        %p158 = pneg %p87
        %s159 = sand.u32 %s77, 1
        %s160 = scalar_lea.sflag [#allocation5], %s159
        %s161 = sand.u32 %s77, 1
        %s162 = smul.addr %s161, 2
        %s163 = scalar_lea.vmem [#allocation6], %s162
        %s164 = smul.u32 2, %s24
        %s165 = smul.u32 2, %s24
        %p166 = scmp.eq.s32.totalorder %s25, 0
        // Predicated region
        $region29: #{tpu_custom_call.1} parent=23 // pred_check
          %p167 = pneg %p166
        $region30: #{tpu_custom_call.1} parent=23 // pred_check_branch
          %169 = sbr.rel (%p167) target = $region32
        $region31: #{tpu_custom_call.1} parent=23 // pred_region
          %v170 = vlaneseq
          %vm171 = vcmp.ge.s32.totalorder %v170, 0
          %vm172 = vcmp.lt.s32.totalorder %v170, 256
          %vm173 = vmand %vm171, %vm172
          %174 = vst.msk [vmem:[#allocation2] sm:$0x3] %vm173, 0.0
        $region32: #{tpu_custom_call.1} parent=23 // pred_fallthru
          _
        %v175 = vld [vmem:[%s144] sm:$0xff]
        %v176 = vld [vmem:[#allocation2] sm:$0x3]
        %178 = vst [vmem:[#allocation1] ss:$2 sm:$0xff] %v175
        %v179 = vld.sshfl [vmem:[#allocation1] sm:$0xff pattern:$0x75316420]
        %v180 = vld.sshfl [vmem:[#allocation1 + $0x8] sm:$0xff pattern:$0x75316420]
        %vm183 = vcmask 1043456
        %v184 = vsel %vm183, %v179, 0.0
        %v185 = vrot.slane %v184, 4
        %v186 = vadd.f32 %v184, %v185
        %v187 = vrot.slane %v186, 2
        %v188 = vadd.f32 %v186, %v187
        %v189 = vrot.slane %v188, 1
        %v190 = vadd.f32 %v188, %v189
        %v191 = vsel %vm183, %v180, 0.0
        %v192 = vrot.slane %v191, 4
        %v193 = vadd.f32 %v191, %v192
        %v194 = vrot.slane %v193, 2
        %v195 = vadd.f32 %v193, %v194
        %v196 = vrot.slane %v195, 1
        %v197 = vadd.f32 %v195, %v196
        %v200 = vrot.slane %v197, 7
        %vm201 = vcmask 1040384
        %v202 = vsel %vm201, %v190, %v200
        %v204 = vadd.f32 %v176, %v202
        %v205 = vlaneseq
        %vm206 = vcmp.ge.s32.totalorder %v205, 0
        %vm207 = vcmp.lt.s32.totalorder %v205, 256
        %vm208 = vmand %vm206, %vm207
        %209 = vst.msk [vmem:[#allocation2] sm:$0x3] %vm208, %v204
        // Predicated region
        $region33: #{tpu_custom_call.1} parent=23 // pred_check
          %p210 = pneg %p166
        $region34: #{tpu_custom_call.1} parent=23 // pred_check_branch
          %212 = sbr.rel (%p210) target = $region36
        $region35: #{tpu_custom_call.1} parent=23 // pred_region
          %v213 = vld [vmem:[#allocation2] sm:$0x3]
          %v214 = vmul.f32 %v213, 0.25
          %215 = vst.msk [vmem:[%s163] sm:$0x3] %vm208, %v214
        $region36: #{tpu_custom_call.1} parent=23 // pred_fallthru
          _
        %s216 = sand.u32 %s77, 1
        %s217 = scalar_lea.sflag [#allocation5], %s216
        %s218 = sand.u32 %s77, 1
        %s219 = smul.addr %s218, 2
        %s220 = scalar_lea.vmem [#allocation6], %s219
        // Predicated region
        $region37: #{tpu_custom_call.1} parent=23 // pred_check
          %p221 = pneg %p87
        $region38: #{tpu_custom_call.1} parent=23 // pred_check_branch
          %223 = sbr.rel (%p221) target = $region40
        $region39: #{tpu_custom_call.1} parent=23 // pred_region
          %s224 = smul.u32 2, %s24
          %226 = vsyncadd %s217, 0
          %s227 = smul.addr %s23, 2
          %s228 = sadd.s32 %s224, %s227
          %s229 = scalar_lea.hbm %s1, %s228
          %s231 = sshll.u32 %s220, 4
          %s232 = int_to_ptr.vmem [resolvable:$true] %s231
          %s233 = sshll.u32 %s229, 4
          %s234 = int_to_ptr.hbm [resolvable:$true] %s233
          %236 = dma.vmem_to_hbm [thread:$0]  %s232, 32, %s234, %s217
        $region40: #{tpu_custom_call.1} parent=23 // pred_fallthru
          _
      $region24: #{tpu_custom_call.1} parent=5 // pred_fallthru
        _
      %p237 = scmp.le.s32.totalorder 2, %s13
      // Predicated region
      $region41: #{tpu_custom_call.1} parent=5 // pred_check
        %p238 = pneg %p237
      $region42: #{tpu_custom_call.1} parent=5 // pred_check_branch
        %240 = sbr.rel (%p238) target = $region44
      $region43: #{tpu_custom_call.1} parent=5 // pred_region
        %s241 = ssub.s32 %s13, 2
        // Predicated region
        $region45: #{tpu_custom_call.1} parent=43 // pred_check
          %p242 = pneg %p93
        $region46: #{tpu_custom_call.1} parent=43 // pred_check_branch
          %244 = sbr.rel (%p242) target = $region48
        $region47: #{tpu_custom_call.1} parent=43 // pred_region
          %s245 = sand.u32 %s78, 1
          %s246 = scalar_lea.sflag [#allocation5], %s245
          %s247 = sand.u32 %s78, 1
          %s248 = smul.addr %s247, 2
          %s249 = scalar_lea.vmem [#allocation6], %s248
          %251 = dma.done %s246, 32
        $region48: #{tpu_custom_call.1} parent=43 // pred_fallthru
          _
      $region44: #{tpu_custom_call.1} parent=5 // pred_fallthru
        _
    $region6: #{tpu_custom_call.1} parent=1 // loop_footer
      %s17 = sadd.s32 1, %s13
    $region7: #{tpu_custom_call.1} parent=1 // loop_footer_branch
      %12 = sbr.rel target = $region3
    $region8: #{tpu_custom_call.1} parent=1 // loop_exit
      _
    %252 = vsyncpa [#allocation4], 1
    %s253 = scalar_lea.sflag [#allocation4], 1
    %254 = vsyncpa %s253, 1
    %255 = vsyncpa [#allocation5], 1
    %s256 = scalar_lea.sflag [#allocation5], 1
    %257 = vsyncpa %s256, 1

</llo_original>
